<compile_context>
chip_gen: v7x
topology: tpu7x:2x2x1
jax: 0.10.0
libtpu: 0.0.40
codegen_flags: <defaults>
</compile_context>

<pallas_src>
import math
import numpy as np
import jax
import jax.numpy as jnp
from jax.experimental import pallas as pl
from jax.experimental.pallas import tpu as pltpu

# ---------------- configuration (SSLWrapper.__init__ analogues) ----------------
N_VARS = 2          # variables_per_equation for the (single) equation in the batch
N_ENC = 3           # params.n_encoding_channels
N_STATIC = 1        # n_static_channels
TOKEN = 1 + N_ENC + N_STATIC
C_EMB = N_VARS * TOKEN               # channels after encode_variables
D_HID = 32                           # encoder hidden width
ENABLE_CLS = True                    # params.enable_cls_token
CLS_OFF = 1 if ENABLE_CLS else 0
C_OUT_FULL = CLS_OFF + C_EMB         # decoder output channels (cls + embedded)
LANE_TILE_TARGET = 8192              # spatial tile on the lane axis (review: 4096-8192)
MATMUL_DTYPE = jnp.bfloat16          # operand dtype for the K=32 matmuls (f32 accumulation)

N_SHARED = N_VARS * (N_ENC + N_STATIC)     # 8 batch-shared embedding channels
N_SHARED_P = N_SHARED + 1                  # + ones row carrying b1 through W1

VAR_ROWS = np.arange(N_VARS) * TOKEN                                   # rows of W1 fed by x
SHARED_ROWS = np.array([r for r in range(C_EMB) if r % TOKEN != 0])    # rows fed by shared fields


# ---------------- Pallas kernel: encoder -> predictor -> decoder ----------------
def ssl_mlp_kernel(x_ref, s_ref, w1v_ref, w1s_ref, w2_ref, b2_ref, w3_ref, b3_ref, o_ref):
    # x_ref:  (1, N_VARS, TN)   raw variables (per-batch), spatial on lanes
    # s_ref:  (N_SHARED_P, TN)  raw batch-shared channels + ones row (fetched once per tile)
    # encoder (lifting) on the MXU; b1 is folded in via the ones row of s_ref / w1s_ref.
    h = (jnp.dot(w1v_ref[...], x_ref[0], preferred_element_type=jnp.float32)
         + jnp.dot(w1s_ref[...], s_ref[...], preferred_element_type=jnp.float32))
    h = jax.nn.gelu(h)                                                  # (D_HID, TN) f32

    # predictor: (D_HID, D_HID) @ (D_HID, TN), bf16 operands, f32 accumulation
    h = jnp.dot(w2_ref[...], h.astype(MATMUL_DTYPE),
                preferred_element_type=jnp.float32) + b2_ref[...]
    h = jax.nn.gelu(h)

    # decoder projection (CLS column already removed from W3/b3 by the wrapper)
    o = jnp.dot(w3_ref[...], h.astype(MATMUL_DTYPE),
                preferred_element_type=jnp.float32) + b3_ref[...]
    o_ref[0] = o.astype(o_ref.dtype)


def _spatial_tile(hw):
    """Pick a lane-axis tile (multiple of 128) and the padded spatial extent."""
    hw128 = ((hw + 127) // 128) * 128
    tn = min(LANE_TILE_TARGET, hw128)
    hw_pad = ((hw + tn - 1) // tn) * tn
    return tn, hw_pad


def run_ssl_mlp(x_flat, shared, kparams):
    """x_flat: (B, N_VARS, HW) f32; shared: (N_SHARED_P, HW) f32 -> (B, C_EMB, HW)."""
    B, V, HW = x_flat.shape
    tn, hw_pad = _spatial_tile(HW)
    if hw_pad != HW:
        x_flat = jnp.pad(x_flat, ((0, 0), (0, 0), (0, hw_pad - HW)))
        shared = jnp.pad(shared, ((0, 0), (0, hw_pad - HW)))
    w1v_t, w1s_t, w2_t, b2c, w3_t, b3c = kparams
    n_tiles = hw_pad // tn

    out = pl.pallas_call(
        ssl_mlp_kernel,
        out_shape=jax.ShapeDtypeStruct((B, C_EMB, hw_pad), x_flat.dtype),
        grid_spec=pltpu.PrefetchScalarGridSpec(
            num_scalar_prefetch=0,
            # batch innermost: shared/weight blocks keep the same block index across
            # consecutive steps -> DMA'd once per spatial tile, not once per (b, j).
            grid=(n_tiles, B),
            in_specs=[
                pl.BlockSpec((1, V, tn), lambda j, b: (b, 0, j)),         # raw variables
                pl.BlockSpec((N_SHARED_P, tn), lambda j, b: (0, j)),      # shared channels + ones
                pl.BlockSpec(w1v_t.shape, lambda j, b: (0, 0)),
                pl.BlockSpec(w1s_t.shape, lambda j, b: (0, 0)),
                pl.BlockSpec(w2_t.shape, lambda j, b: (0, 0)),
                pl.BlockSpec(b2c.shape, lambda j, b: (0, 0)),
                pl.BlockSpec(w3_t.shape, lambda j, b: (0, 0)),
                pl.BlockSpec(b3c.shape, lambda j, b: (0, 0)),
            ],
            out_specs=pl.BlockSpec((1, C_EMB, tn), lambda j, b: (b, 0, j)),
        ),
        compiler_params=pltpu.CompilerParams(
            dimension_semantics=("parallel", "parallel")),
    )(x_flat, shared, w1v_t, w1s_t, w2_t, b2c, w3_t, b3c)

    if hw_pad != HW:
        out = out[:, :, :HW]
    return out


# ---------------- plain-JAX glue: parameter / shared-channel preparation ----------------
def build_shared_channels(var_encodings, static_features, H, W):
    """Raw batch-shared embedding channels (+ ones row for b1): (N_SHARED_P, H*W)."""
    fields = []
    for v in range(N_VARS):
        fields.append(var_encodings[v])                                        # (N_ENC, H, W)
        fields.append(jnp.broadcast_to(static_features[0], (N_STATIC, H, W)))  # (N_STATIC, H, W)
    fields = jnp.concatenate(fields, axis=0).reshape(N_SHARED, H * W)
    ones = jnp.ones((1, H * W), fields.dtype)
    return jnp.concatenate([fields, ones], axis=0)                             # (N_SHARED_P, HW)


def make_kernel_params(params):
    w1, b1, w2, b2, w3, b3 = params
    w1v_t = jnp.transpose(w1[VAR_ROWS])                                # (D_HID, N_VARS)
    w1s = jnp.concatenate([w1[SHARED_ROWS], b1.reshape(1, D_HID)], axis=0)
    w1s_t = jnp.transpose(w1s)                                         # (D_HID, N_SHARED_P), b1 folded
    w2_t = jnp.transpose(w2).astype(MATMUL_DTYPE)                      # (D_HID, D_HID)
    b2c = b2.reshape(D_HID, 1)
    w3_t = jnp.transpose(w3[:, CLS_OFF:CLS_OFF + C_EMB]).astype(MATMUL_DTYPE)  # (C_EMB, D_HID), CLS removed
    b3c = b3[0, CLS_OFF:CLS_OFF + C_EMB].reshape(C_EMB, 1)
    return (w1v_t, w1s_t, w2_t, b2c, w3_t, b3c)


def check_equations(equations):
    """Mirrors the ValueError logic of SSLWrapper.forward. Kept OUTSIDE the jitted
    forward so no host sync sits on the dispatch path."""
    if equations is None or equations.size == 0:
        raise ValueError("The equation(s) must be defined for a variable encoding.")
    eqs = set(np.asarray(jax.device_get(equations)).tolist())
    if len(eqs) > 1:
        raise ValueError("All equations in a batch must be of the same kind.")


def ssl_wrapper_forward(x, var_encodings, static_features, params):
    """SSLWrapper.forward, stage=PREDICTIVE, grid_type='uniform', reconstruction=True.
    Jittable: no host syncs; works directly on NCHW."""
    B, V, H, W = x.shape
    x_flat = x.reshape(B, V, H * W)
    shared = build_shared_channels(var_encodings, static_features, H, W)
    kparams = make_kernel_params(params)
    out_flat = run_ssl_mlp(x_flat, shared, kparams)                    # (B, C_EMB, HW)
    out = out_flat.reshape(B, C_EMB, H, W)
    return out, None, None, None                                       # (out, clean, aug, neg)


ssl_wrapper_forward_jit = jax.jit(ssl_wrapper_forward)


# ---------------- pure-JAX reference (full, unfused f32 path) ----------------
def encode_variables(x, var_encodings, static_features):
    """x: (B, n_vars, H, W) -> (B, n_vars*TOKEN, H, W) (mirrors SSLWrapper.encode_variables)."""
    B, V, H, W = x.shape
    pieces = []
    for i in range(V):
        xi = x[:, i][:, None]
        enc = jnp.broadcast_to(var_encodings[i][None], (B, N_ENC, H, W))
        stat = jnp.broadcast_to(static_features, (B, N_STATIC, H, W))
        pieces.append(jnp.concatenate([xi, enc, stat], axis=1))
    return jnp.concatenate(pieces, axis=1)


def reference_forward(x, var_encodings, static_features, params):
    w1, b1, w2, b2, w3, b3 = params
    x_emb = encode_variables(x, var_encodings, static_features)
    B, C, H, W = x_emb.shape
    t = jnp.transpose(x_emb, (0, 2, 3, 1)).reshape(B * H * W, C)
    h = jax.nn.gelu(t @ w1 + b1)
    h = jax.nn.gelu(h @ w2 + b2)
    o = h @ w3 + b3
    o = o.reshape(B, H, W, C_OUT_FULL).transpose(0, 3, 1, 2)
    return o[:, CLS_OFF:CLS_OFF + C, :, :]


# ---------------- deterministic parameter / input construction ----------------
def make_params(key):
    k1, k2, k3 = jax.random.split(key, 3)
    w1 = jax.random.normal(k1, (C_EMB, D_HID), jnp.float32) / math.sqrt(C_EMB)
    b1 = jnp.zeros((1, D_HID), jnp.float32)
    w2 = jax.random.normal(k2, (D_HID, D_HID), jnp.float32) / math.sqrt(D_HID)
    b2 = jnp.zeros((1, D_HID), jnp.float32)
    w3 = jax.random.normal(k3, (D_HID, C_OUT_FULL), jnp.float32) / math.sqrt(D_HID)
    b3 = jnp.zeros((1, C_OUT_FULL), jnp.float32)
    return (w1, b1, w2, b2, w3, b3)


def make_variable_encodings(H, W):
    # TODO(synk): FourierVariableEncoding3D is a learned spectral encoding; deterministic
    # sin/cos surrogate of the same shape (n_vars, N_ENC, H, W) used here.
    hh = jnp.arange(H, dtype=jnp.float32)[:, None] / H
    ww = jnp.arange(W, dtype=jnp.float32)[None, :] / W
    encs = []
    for v in range(N_VARS):
        chans = [jnp.sin(2.0 * jnp.pi * (e + 1) * hh) * jnp.cos(2.0 * jnp.pi * (v + 1) * ww)
                 for e in range(N_ENC)]
        encs.append(jnp.stack(chans, axis=0))
    return jnp.stack(encs, axis=0)  # (N_VARS, N_ENC, H, W)


def make_static_features(H, W):
    hh = jnp.linspace(-1.0, 1.0, H)[:, None]
    ww = jnp.linspace(-1.0, 1.0, W)[None, :]
    return (hh * ww)[None, None].astype(jnp.float32).repeat(N_STATIC, axis=1)  # (1, N_STATIC, H, W)


if __name__ == "__main__":
    B, H, W = 2, 16, 16
    key = jax.random.PRNGKey(0)
    kx, kp = jax.random.split(key)

    x = jax.random.normal(kx, (B, N_VARS, H, W), jnp.float32)   # (batch, n_vars, *domain)
    equations = jnp.zeros((B,), jnp.int32)                       # all same equation kind
    var_encodings = make_variable_encodings(H, W)
    static_features = make_static_features(H, W)
    params = make_params(kp)

    check_equations(equations)   # host-side validation, outside the jitted forward

    out, _, _, _ = ssl_wrapper_forward_jit(x, var_encodings, static_features, params)
    out = jax.block_until_ready(out)

    ref = reference_forward(x, var_encodings, static_features, params)
    assert out.shape == (B, C_EMB, H, W), out.shape
    # Tolerance covers bf16 operands in the K=32 matmuls (f32 accumulation); with
    # MATMUL_DTYPE = jnp.float32 the kernel agrees with the reference to <1e-3.
    assert jnp.allclose(out, ref, atol=2e-2, rtol=2e-2), "mismatch vs reference"

    print("KERNEL_OK")
</pallas_src>

<mosaic_0001>
module attributes {stable_mosaic.version = 11 : i64} {
  func.func @ssl_mlp_kernel(%arg0: i32, %arg1: i32, %arg2: memref<1x2x256xf32, #tpu.memory_space<vmem>>, %arg3: memref<9x256xf32, #tpu.memory_space<vmem>>, %arg4: memref<32x2xf32, #tpu.memory_space<vmem>>, %arg5: memref<32x9xf32, #tpu.memory_space<vmem>>, %arg6: memref<32x32xbf16, #tpu.memory_space<vmem>>, %arg7: memref<32x1xf32, #tpu.memory_space<vmem>>, %arg8: memref<10x32xbf16, #tpu.memory_space<vmem>>, %arg9: memref<10x1xf32, #tpu.memory_space<vmem>>, %arg10: memref<1x10x256xf32, #tpu.memory_space<vmem>>) attributes {dimension_semantics = [#tpu.dimension_semantics<parallel>, #tpu.dimension_semantics<parallel>], iteration_bounds = array<i64: 1, 2>, scalar_prefetch = 0 : i64, scratch_operands = 0 : i64, tpu.core_type = #tpu.core_type<tc>, window_params = [{transform_indices = @transform_0, window_bounds = array<i64: 1, 2, 256>}, {transform_indices = @transform_1, window_bounds = array<i64: 9, 256>}, {pipeline_mode = #tpu.pipeline_mode<synchronous>, transform_indices = @transform_2, window_bounds = array<i64: 32, 2>}, {pipeline_mode = #tpu.pipeline_mode<synchronous>, transform_indices = @transform_3, window_bounds = array<i64: 32, 9>}, {pipeline_mode = #tpu.pipeline_mode<synchronous>, transform_indices = @transform_4, window_bounds = array<i64: 32, 32>}, {pipeline_mode = #tpu.pipeline_mode<synchronous>, transform_indices = @transform_5, window_bounds = array<i64: 32, 1>}, {pipeline_mode = #tpu.pipeline_mode<synchronous>, transform_indices = @transform_6, window_bounds = array<i64: 10, 32>}, {pipeline_mode = #tpu.pipeline_mode<synchronous>, transform_indices = @transform_7, window_bounds = array<i64: 10, 1>}, {transform_indices = @transform_8, window_bounds = array<i64: 1, 10, 256>}]} {
    %c0 = arith.constant 0 : index
    %c0_0 = arith.constant 0 : index
    %0 = vector.load %arg4[%c0, %c0_0] : memref<32x2xf32, #tpu.memory_space<vmem>>, vector<32x2xf32>
    %c0_1 = arith.constant 0 : index
    %c0_2 = arith.constant 0 : index
    %c0_3 = arith.constant 0 : index
    %1 = vector.load %arg2[%c0_1, %c0_2, %c0_3] : memref<1x2x256xf32, #tpu.memory_space<vmem>>, vector<1x2x256xf32>
    %2 = vector.shape_cast %1 : vector<1x2x256xf32> to vector<2x256xf32>
    %cst = arith.constant dense<0.000000e+00> : vector<32x256xf32>
    %3 = tpu.matmul %0, %2, %cst {dimension_numbers = #tpu.dot_dimension_numbers<[1], [0], [0], [1], [0, 0, 1, 1], [], []>} : vector<32x2xf32>, vector<2x256xf32>, vector<32x256xf32> -> vector<32x256xf32>
    %c0_4 = arith.constant 0 : index
    %c0_5 = arith.constant 0 : index
    %4 = vector.load %arg5[%c0_4, %c0_5] : memref<32x9xf32, #tpu.memory_space<vmem>>, vector<32x9xf32>
    %c0_6 = arith.constant 0 : index
    %c0_7 = arith.constant 0 : index
    %5 = vector.load %arg3[%c0_6, %c0_7] : memref<9x256xf32, #tpu.memory_space<vmem>>, vector<9x256xf32>
    %cst_8 = arith.constant dense<0.000000e+00> : vector<32x256xf32>
    %6 = tpu.matmul %4, %5, %cst_8 {dimension_numbers = #tpu.dot_dimension_numbers<[1], [0], [0], [1], [0, 0, 1, 1], [], []>} : vector<32x9xf32>, vector<9x256xf32>, vector<32x256xf32> -> vector<32x256xf32>
    %7 = arith.addf %3, %6 : vector<32x256xf32>
    %8 = arith.mulf %7, %7 : vector<32x256xf32>
    %9 = arith.mulf %7, %8 : vector<32x256xf32>
    %cst_9 = arith.constant 4.471500e-02 : f32
    %10 = vector.broadcast %cst_9 : f32 to vector<32x256xf32>
    %11 = arith.mulf %10, %9 : vector<32x256xf32>
    %12 = arith.addf %7, %11 : vector<32x256xf32>
    %cst_10 = arith.constant 0.797884583 : f32
    %13 = vector.broadcast %cst_10 : f32 to vector<32x256xf32>
    %14 = arith.mulf %13, %12 : vector<32x256xf32>
    %15 = math.tanh %14 : vector<32x256xf32>
    %cst_11 = arith.constant 1.000000e+00 : f32
    %16 = vector.broadcast %cst_11 : f32 to vector<32x256xf32>
    %17 = arith.addf %16, %15 : vector<32x256xf32>
    %cst_12 = arith.constant 5.000000e-01 : f32
    %18 = vector.broadcast %cst_12 : f32 to vector<32x256xf32>
    %19 = arith.mulf %18, %17 : vector<32x256xf32>
    %20 = arith.mulf %7, %19 : vector<32x256xf32>
    %c0_13 = arith.constant 0 : index
    %c0_14 = arith.constant 0 : index
    %21 = vector.load %arg6[%c0_13, %c0_14] : memref<32x32xbf16, #tpu.memory_space<vmem>>, vector<32x32xbf16>
    %22 = arith.truncf %20 : vector<32x256xf32> to vector<32x256xbf16>
    %cst_15 = arith.constant dense<0.000000e+00> : vector<32x256xf32>
    %23 = tpu.matmul %21, %22, %cst_15 {dimension_numbers = #tpu.dot_dimension_numbers<[1], [0], [0], [1], [0, 0, 1, 1], [], []>} : vector<32x32xbf16>, vector<32x256xbf16>, vector<32x256xf32> -> vector<32x256xf32>
    %c0_16 = arith.constant 0 : index
    %c0_17 = arith.constant 0 : index
    %24 = vector.load %arg7[%c0_16, %c0_17] : memref<32x1xf32, #tpu.memory_space<vmem>>, vector<32x1xf32>
    %25 = vector.broadcast %24 : vector<32x1xf32> to vector<32x256xf32>
    %26 = arith.addf %23, %25 : vector<32x256xf32>
    %27 = arith.mulf %26, %26 : vector<32x256xf32>
    %28 = arith.mulf %26, %27 : vector<32x256xf32>
    %cst_18 = arith.constant 4.471500e-02 : f32
    %29 = vector.broadcast %cst_18 : f32 to vector<32x256xf32>
    %30 = arith.mulf %29, %28 : vector<32x256xf32>
    %31 = arith.addf %26, %30 : vector<32x256xf32>
    %cst_19 = arith.constant 0.797884583 : f32
    %32 = vector.broadcast %cst_19 : f32 to vector<32x256xf32>
    %33 = arith.mulf %32, %31 : vector<32x256xf32>
    %34 = math.tanh %33 : vector<32x256xf32>
    %cst_20 = arith.constant 1.000000e+00 : f32
    %35 = vector.broadcast %cst_20 : f32 to vector<32x256xf32>
    %36 = arith.addf %35, %34 : vector<32x256xf32>
    %cst_21 = arith.constant 5.000000e-01 : f32
    %37 = vector.broadcast %cst_21 : f32 to vector<32x256xf32>
    %38 = arith.mulf %37, %36 : vector<32x256xf32>
    %39 = arith.mulf %26, %38 : vector<32x256xf32>
    %c0_22 = arith.constant 0 : index
    %c0_23 = arith.constant 0 : index
    %40 = vector.load %arg8[%c0_22, %c0_23] : memref<10x32xbf16, #tpu.memory_space<vmem>>, vector<10x32xbf16>
    %41 = arith.truncf %39 : vector<32x256xf32> to vector<32x256xbf16>
    %cst_24 = arith.constant dense<0.000000e+00> : vector<10x256xf32>
    %42 = tpu.matmul %40, %41, %cst_24 {dimension_numbers = #tpu.dot_dimension_numbers<[1], [0], [0], [1], [0, 0, 1, 1], [], []>} : vector<10x32xbf16>, vector<32x256xbf16>, vector<10x256xf32> -> vector<10x256xf32>
    %c0_25 = arith.constant 0 : index
    %c0_26 = arith.constant 0 : index
    %43 = vector.load %arg9[%c0_25, %c0_26] : memref<10x1xf32, #tpu.memory_space<vmem>>, vector<10x1xf32>
    %44 = vector.broadcast %43 : vector<10x1xf32> to vector<10x256xf32>
    %45 = arith.addf %42, %44 : vector<10x256xf32>
    %c0_27 = arith.constant 0 : index
    %c0_28 = arith.constant 0 : index
    %c0_29 = arith.constant 0 : index
    %46 = vector.load %arg10[%c0_27, %c0_28, %c0_29] : memref<1x10x256xf32, #tpu.memory_space<vmem>>, vector<1x10x256xf32>
    %47 = vector.shape_cast %46 : vector<1x10x256xf32> to vector<10x256xf32>
    %48 = vector.shape_cast %45 : vector<10x256xf32> to vector<1x10x256xf32>
    tpu.vector_store %arg10[%c0_27, %c0_28, %c0_29], %48 {strides = array<i32>} : memref<1x10x256xf32, #tpu.memory_space<vmem>>, vector<1x10x256xf32>,
    return
  }
  func.func @transform_0(%arg0: i32, %arg1: i32) -> (i32, i32, i32) {
    %c0_i32 = arith.constant 0 : i32
    %c0_i32_0 = arith.constant 0 : i32
    return %arg1, %c0_i32, %arg0 : i32, i32, i32
  }
  func.func @transform_1(%arg0: i32, %arg1: i32) -> (i32, i32) {
    %c0_i32 = arith.constant 0 : i32
    %c0_i32_0 = arith.constant 0 : i32
    return %c0_i32, %arg0 : i32, i32
  }
  func.func @transform_2(%arg0: i32, %arg1: i32) -> (i32, i32) {
    %c0_i32 = arith.constant 0 : i32
    %c0_i32_0 = arith.constant 0 : i32
    %c0_i32_1 = arith.constant 0 : i32
    return %c0_i32, %c0_i32_0 : i32, i32
  }
  func.func @transform_3(%arg0: i32, %arg1: i32) -> (i32, i32) {
    %c0_i32 = arith.constant 0 : i32
    %c0_i32_0 = arith.constant 0 : i32
    %c0_i32_1 = arith.constant 0 : i32
    return %c0_i32, %c0_i32_0 : i32, i32
  }
  func.func @transform_4(%arg0: i32, %arg1: i32) -> (i32, i32) {
    %c0_i32 = arith.constant 0 : i32
    %c0_i32_0 = arith.constant 0 : i32
    %c0_i32_1 = arith.constant 0 : i32
    return %c0_i32, %c0_i32_0 : i32, i32
  }
  func.func @transform_5(%arg0: i32, %arg1: i32) -> (i32, i32) {
    %c0_i32 = arith.constant 0 : i32
    %c0_i32_0 = arith.constant 0 : i32
    %c0_i32_1 = arith.constant 0 : i32
    return %c0_i32, %c0_i32_0 : i32, i32
  }
  func.func @transform_6(%arg0: i32, %arg1: i32) -> (i32, i32) {
    %c0_i32 = arith.constant 0 : i32
    %c0_i32_0 = arith.constant 0 : i32
    %c0_i32_1 = arith.constant 0 : i32
    return %c0_i32, %c0_i32_0 : i32, i32
  }
  func.func @transform_7(%arg0: i32, %arg1: i32) -> (i32, i32) {
    %c0_i32 = arith.constant 0 : i32
    %c0_i32_0 = arith.constant 0 : i32
    %c0_i32_1 = arith.constant 0 : i32
    return %c0_i32, %c0_i32_0 : i32, i32
  }
  func.func @transform_8(%arg0: i32, %arg1: i32) -> (i32, i32, i32) {
    %c0_i32 = arith.constant 0 : i32
    %c0_i32_0 = arith.constant 0 : i32
    return %arg1, %c0_i32, %arg0 : i32, i32, i32
  }
}

</mosaic_0001>

<llo_original>
// kernel: ssl_wrapper_forward.1
$region0: #{ssl_wrapper_forward.1}
  #allocation0 [shape = 'u32[]', space=smem, size = 0x4, offset = 0x4, fixed_abs, tag = 'smem constant byte address 0x4 - core index']
  #allocation1 [shape = 'u32[144,128]{1,0:T(1,128)}', space=vmem, size = 0x12000, scoped, tag = 'internal scratch']
  %s0 = inlined_call_operand.vmem [shape: f32[2,2,256], index: 0, kind: input, shape index: {}]
  %s1 = inlined_call_operand.vmem [shape: f32[9,256], index: 1, kind: input, shape index: {}]
  %s2 = inlined_call_operand.vmem [shape: f32[32,2], index: 2, kind: input, shape index: {}]
  %s3 = inlined_call_operand.vmem [shape: f32[32,9], index: 3, kind: input, shape index: {}]
  %s4 = inlined_call_operand.vmem [shape: bf16[32,32], index: 4, kind: input, shape index: {}]
  %s5 = inlined_call_operand.vmem [shape: f32[32,1], index: 5, kind: input, shape index: {}]
  %s6 = inlined_call_operand.vmem [shape: bf16[10,32], index: 6, kind: input, shape index: {}]
  %s7 = inlined_call_operand.vmem [shape: f32[10,1], index: 7, kind: input, shape index: {}]
  %s8 = inlined_call_operand.vmem [shape: f32[2,10,256], index: 8, kind: output, shape index: {}]
  %s9 = sld [smem:[#allocation0]]
  $region65: #{ssl_wrapper_forward.1} parent=0
    _
  %s11 = ssub.s32 1, %s9
  %s12 = scalar_select 0, %s11, %s9
  loop: start=0, step=1, limit=4
  $region2: #{ssl_wrapper_forward.1} parent=0 // loop_pre_header
    _
  $region3: #{ssl_wrapper_forward.1} parent=0 // loop_header
    %s14 = sphi 0, %s18
    %p15 = scmp.ge.s32.totalorder %s14, 4
    %s21 = sphi 0, %s33
    %s22 = sphi 0, %s29
    %s23 = sphi 0, %s21
    %s24 = sphi 0, %s22
    %s25 = sphi 0, %s23
    %s26 = sphi 0, %s24
    %s38 = sphi 0, %s40
    %s41 = sphi 0, %s38
    %s42 = sphi 0, %s41
    %s58 = sphi 0, %s42
    %s64 = sphi 0, %s66
    %s67 = sphi 0, %s64
    %s68 = sphi 0, %s67
    %s84 = sphi 0, %s68
    %s88 = sphi 0, %s88
    %s90 = sphi 0, %s88
    %s91 = sphi 0, %s90
    %s105 = sphi 0, %s91
    %s109 = sphi 0, %s109
    %s111 = sphi 0, %s109
    %s112 = sphi 0, %s111
    %s126 = sphi 0, %s112
    %s130 = sphi 0, %s130
    %s132 = sphi 0, %s130
    %s133 = sphi 0, %s132
    %s147 = sphi 0, %s133
    %s151 = sphi 0, %s151
    %s153 = sphi 0, %s151
    %s154 = sphi 0, %s153
    %s168 = sphi 0, %s154
    %s172 = sphi 0, %s172
    %s174 = sphi 0, %s172
    %s175 = sphi 0, %s174
    %s189 = sphi 0, %s175
    %s193 = sphi 0, %s193
    %s195 = sphi 0, %s193
    %s196 = sphi 0, %s195
    %s210 = sphi 0, %s196
    %s218 = sphi 0, %s220
    %s221 = sphi 0, %s218
    %s222 = sphi 0, %s221
    %s238 = sphi 0, %s222
  $region4: #{ssl_wrapper_forward.1} parent=0 // loop_header_branch
    %17 = sbr.rel (%p15) target = $region8
  $region5: #{ssl_wrapper_forward.1} parent=0 // loop_body
    %s19 = ssub.s32 %s14, 1
    %s20 = ssub.s32 %s14, 2
    %s27 = sadd.s32 1, %s22
    %p28 = scmp.ge.s32.totalorder %s27, 2
    %s29 = scalar_select %p28, 0, %s27
    %s30 = sadd.s32 1, %s21
    %s31 = scalar_select %p28, %s30, %s21
    %p32 = scmp.ge.s32.totalorder %s31, 1
    %s33 = scalar_select %p32, 0, %s31
    %s34 = ssub.s32 %s22, %s29
    %s35 = ssub.s32 %s21, %s33
    %s36 = sor.u32 %s34, %s35
    %p37 = scmp.eq.s32.totalorder %s36, 0
    %s39 = sadd.s32 %s38, 1
    %s40 = scalar_select %p37, %s38, %s39
    %p43 = pneg %p37
    %p44 = scmp.eq.s32.totalorder %s14, 1
    %p45 = por %p43, %p44
    %p46 = scmp.ne.s32.totalorder %s38, %s41
    %p47 = scmp.eq.s32.totalorder %s14, 0
    %p48 = por %p46, %p47
    %p49 = scmp.ne.s32.totalorder %s38, %s41
    %p50 = scmp.eq.s32.totalorder %s19, 1
    %p51 = por %p49, %p50
    %p52 = scmp.ne.s32.totalorder %s41, %s42
    %p53 = scmp.eq.s32.totalorder %s19, 0
    %p54 = por %p52, %p53
    %p55 = scmp.ne.s32.totalorder %s41, %s42
    %p56 = scmp.eq.s32.totalorder %s20, 1
    %p57 = por %p55, %p56
    %p59 = scmp.ne.s32.totalorder %s42, %s58
    %p60 = scmp.eq.s32.totalorder %s20, 0
    %p61 = por %p59, %p60
    %s62 = ssub.s32 %s21, %s33
    %p63 = scmp.eq.s32.totalorder %s62, 0
    %s65 = sadd.s32 %s64, 1
    %s66 = scalar_select %p63, %s64, %s65
    %p69 = pneg %p63
    %p70 = scmp.eq.s32.totalorder %s14, 1
    %p71 = por %p69, %p70
    %p72 = scmp.ne.s32.totalorder %s64, %s67
    %p73 = scmp.eq.s32.totalorder %s14, 0
    %p74 = por %p72, %p73
    %p75 = scmp.ne.s32.totalorder %s64, %s67
    %p76 = scmp.eq.s32.totalorder %s19, 1
    %p77 = por %p75, %p76
    %p78 = scmp.ne.s32.totalorder %s67, %s68
    %p79 = scmp.eq.s32.totalorder %s19, 0
    %p80 = por %p78, %p79
    %p81 = scmp.ne.s32.totalorder %s67, %s68
    %p82 = scmp.eq.s32.totalorder %s20, 1
    %p83 = por %p81, %p82
    %p85 = scmp.ne.s32.totalorder %s68, %s84
    %p86 = scmp.eq.s32.totalorder %s20, 0
    %p87 = por %p85, %p86
    %s89 = sadd.s32 %s88, 1
    %p92 = scmp.eq.s32.totalorder %s14, 1
    %p93 = scmp.ne.s32.totalorder %s88, %s90
    %p94 = scmp.eq.s32.totalorder %s14, 0
    %p95 = por %p93, %p94
    %p96 = scmp.ne.s32.totalorder %s88, %s90
    %p97 = scmp.eq.s32.totalorder %s19, 1
    %p98 = por %p96, %p97
    %p99 = scmp.ne.s32.totalorder %s90, %s91
    %p100 = scmp.eq.s32.totalorder %s19, 0
    %p101 = por %p99, %p100
    %p102 = scmp.ne.s32.totalorder %s90, %s91
    %p103 = scmp.eq.s32.totalorder %s20, 1
    %p104 = por %p102, %p103
    %p106 = scmp.ne.s32.totalorder %s91, %s105
    %p107 = scmp.eq.s32.totalorder %s20, 0
    %p108 = por %p106, %p107
    %s110 = sadd.s32 %s109, 1
    %p113 = scmp.eq.s32.totalorder %s14, 1
    %p114 = scmp.ne.s32.totalorder %s109, %s111
    %p115 = scmp.eq.s32.totalorder %s14, 0
    %p116 = por %p114, %p115
    %p117 = scmp.ne.s32.totalorder %s109, %s111
    %p118 = scmp.eq.s32.totalorder %s19, 1
    %p119 = por %p117, %p118
    %p120 = scmp.ne.s32.totalorder %s111, %s112
    %p121 = scmp.eq.s32.totalorder %s19, 0
    %p122 = por %p120, %p121
    %p123 = scmp.ne.s32.totalorder %s111, %s112
    %p124 = scmp.eq.s32.totalorder %s20, 1
    %p125 = por %p123, %p124
    %p127 = scmp.ne.s32.totalorder %s112, %s126
    %p128 = scmp.eq.s32.totalorder %s20, 0
    %p129 = por %p127, %p128
    %s131 = sadd.s32 %s130, 1
    %p134 = scmp.eq.s32.totalorder %s14, 1
    %p135 = scmp.ne.s32.totalorder %s130, %s132
    %p136 = scmp.eq.s32.totalorder %s14, 0
    %p137 = por %p135, %p136
    %p138 = scmp.ne.s32.totalorder %s130, %s132
    %p139 = scmp.eq.s32.totalorder %s19, 1
    %p140 = por %p138, %p139
    %p141 = scmp.ne.s32.totalorder %s132, %s133
    %p142 = scmp.eq.s32.totalorder %s19, 0
    %p143 = por %p141, %p142
    %p144 = scmp.ne.s32.totalorder %s132, %s133
    %p145 = scmp.eq.s32.totalorder %s20, 1
    %p146 = por %p144, %p145
    %p148 = scmp.ne.s32.totalorder %s133, %s147
    %p149 = scmp.eq.s32.totalorder %s20, 0
    %p150 = por %p148, %p149
    %s152 = sadd.s32 %s151, 1
    %p155 = scmp.eq.s32.totalorder %s14, 1
    %p156 = scmp.ne.s32.totalorder %s151, %s153
    %p157 = scmp.eq.s32.totalorder %s14, 0
    %p158 = por %p156, %p157
    %p159 = scmp.ne.s32.totalorder %s151, %s153
    %p160 = scmp.eq.s32.totalorder %s19, 1
    %p161 = por %p159, %p160
    %p162 = scmp.ne.s32.totalorder %s153, %s154
    %p163 = scmp.eq.s32.totalorder %s19, 0
    %p164 = por %p162, %p163
    %p165 = scmp.ne.s32.totalorder %s153, %s154
    %p166 = scmp.eq.s32.totalorder %s20, 1
    %p167 = por %p165, %p166
    %p169 = scmp.ne.s32.totalorder %s154, %s168
    %p170 = scmp.eq.s32.totalorder %s20, 0
    %p171 = por %p169, %p170
    %s173 = sadd.s32 %s172, 1
    %p176 = scmp.eq.s32.totalorder %s14, 1
    %p177 = scmp.ne.s32.totalorder %s172, %s174
    %p178 = scmp.eq.s32.totalorder %s14, 0
    %p179 = por %p177, %p178
    %p180 = scmp.ne.s32.totalorder %s172, %s174
    %p181 = scmp.eq.s32.totalorder %s19, 1
    %p182 = por %p180, %p181
    %p183 = scmp.ne.s32.totalorder %s174, %s175
    %p184 = scmp.eq.s32.totalorder %s19, 0
    %p185 = por %p183, %p184
    %p186 = scmp.ne.s32.totalorder %s174, %s175
    %p187 = scmp.eq.s32.totalorder %s20, 1
    %p188 = por %p186, %p187
    %p190 = scmp.ne.s32.totalorder %s175, %s189
    %p191 = scmp.eq.s32.totalorder %s20, 0
    %p192 = por %p190, %p191
    %s194 = sadd.s32 %s193, 1
    %p197 = scmp.eq.s32.totalorder %s14, 1
    %p198 = scmp.ne.s32.totalorder %s193, %s195
    %p199 = scmp.eq.s32.totalorder %s14, 0
    %p200 = por %p198, %p199
    %p201 = scmp.ne.s32.totalorder %s193, %s195
    %p202 = scmp.eq.s32.totalorder %s19, 1
    %p203 = por %p201, %p202
    %p204 = scmp.ne.s32.totalorder %s195, %s196
    %p205 = scmp.eq.s32.totalorder %s19, 0
    %p206 = por %p204, %p205
    %p207 = scmp.ne.s32.totalorder %s195, %s196
    %p208 = scmp.eq.s32.totalorder %s20, 1
    %p209 = por %p207, %p208
    %p211 = scmp.ne.s32.totalorder %s196, %s210
    %p212 = scmp.eq.s32.totalorder %s20, 0
    %p213 = por %p211, %p212
    %s214 = ssub.s32 %s22, %s29
    %s215 = ssub.s32 %s21, %s33
    %s216 = sor.u32 %s214, %s215
    %p217 = scmp.eq.s32.totalorder %s216, 0
    %s219 = sadd.s32 %s218, 1
    %s220 = scalar_select %p217, %s218, %s219
    %p223 = pneg %p217
    %p224 = scmp.eq.s32.totalorder %s14, 1
    %p225 = por %p223, %p224
    %p226 = scmp.ne.s32.totalorder %s218, %s221
    %p227 = scmp.eq.s32.totalorder %s14, 0
    %p228 = por %p226, %p227
    %p229 = scmp.ne.s32.totalorder %s218, %s221
    %p230 = scmp.eq.s32.totalorder %s19, 1
    %p231 = por %p229, %p230
    %p232 = scmp.ne.s32.totalorder %s221, %s222
    %p233 = scmp.eq.s32.totalorder %s19, 0
    %p234 = por %p232, %p233
    %p235 = scmp.ne.s32.totalorder %s221, %s222
    %p236 = scmp.eq.s32.totalorder %s20, 1
    %p237 = por %p235, %p236
    %p239 = scmp.ne.s32.totalorder %s222, %s238
    %p240 = scmp.eq.s32.totalorder %s20, 0
    %p241 = por %p239, %p240
    %p242 = scmp.le.s32.totalorder 1, %s14
    %p243 = scmp.lt.s32.totalorder %s14, 3
    %p244 = pnand %p242, %p243
    %p245 = pneg %p244
    // Predicated region
    $region9: #{ssl_wrapper_forward.1} parent=5 // pred_check
      _
    $region10: #{ssl_wrapper_forward.1} parent=5 // pred_check_branch
      %247 = sbr.rel (%p244) target = $region12
    $region11: #{ssl_wrapper_forward.1} parent=5 // pred_region
      %s248 = ssub.s32 %s14, 1
      // Predicated region
      $region13: #{ssl_wrapper_forward.1} parent=11 // pred_check
        %p249 = pneg %p80
      $region14: #{ssl_wrapper_forward.1} parent=11 // pred_check_branch
        %251 = sbr.rel (%p249) target = $region16
      $region15: #{ssl_wrapper_forward.1} parent=11 // pred_region
        %s252 = smul.u32 2, %s23
        %p253 = scmp.lt.s32.totalorder %s252, 1
        %s254 = scalar_select %p253, %s252, 1
        %s255 = smul.addr %s254, 8
        %s256 = scalar_lea.vmem %s1, %s255
        %s257 = smul.u32 2, %s23
      $region16: #{ssl_wrapper_forward.1} parent=11 // pred_fallthru
        _
      // Predicated region
      $region17: #{ssl_wrapper_forward.1} parent=11 // pred_check
        %p258 = pneg %p101
      $region18: #{ssl_wrapper_forward.1} parent=11 // pred_check_branch
        %260 = sbr.rel (%p258) target = $region20
      $region19: #{ssl_wrapper_forward.1} parent=11 // pred_region
        _
      $region20: #{ssl_wrapper_forward.1} parent=11 // pred_fallthru
        _
      // Predicated region
      $region21: #{ssl_wrapper_forward.1} parent=11 // pred_check
        %p261 = pneg %p122
      $region22: #{ssl_wrapper_forward.1} parent=11 // pred_check_branch
        %263 = sbr.rel (%p261) target = $region24
      $region23: #{ssl_wrapper_forward.1} parent=11 // pred_region
        _
      $region24: #{ssl_wrapper_forward.1} parent=11 // pred_fallthru
        _
      // Predicated region
      $region25: #{ssl_wrapper_forward.1} parent=11 // pred_check
        %p264 = pneg %p143
      $region26: #{ssl_wrapper_forward.1} parent=11 // pred_check_branch
        %266 = sbr.rel (%p264) target = $region28
      $region27: #{ssl_wrapper_forward.1} parent=11 // pred_region
        _
      $region28: #{ssl_wrapper_forward.1} parent=11 // pred_fallthru
        _
      // Predicated region
      $region29: #{ssl_wrapper_forward.1} parent=11 // pred_check
        %p267 = pneg %p164
      $region30: #{ssl_wrapper_forward.1} parent=11 // pred_check_branch
        %269 = sbr.rel (%p267) target = $region32
      $region31: #{ssl_wrapper_forward.1} parent=11 // pred_region
        _
      $region32: #{ssl_wrapper_forward.1} parent=11 // pred_fallthru
        _
      // Predicated region
      $region33: #{ssl_wrapper_forward.1} parent=11 // pred_check
        %p270 = pneg %p185
      $region34: #{ssl_wrapper_forward.1} parent=11 // pred_check_branch
        %272 = sbr.rel (%p270) target = $region36
      $region35: #{ssl_wrapper_forward.1} parent=11 // pred_region
        _
      $region36: #{ssl_wrapper_forward.1} parent=11 // pred_fallthru
        _
      // Predicated region
      $region37: #{ssl_wrapper_forward.1} parent=11 // pred_check
        %p273 = pneg %p206
      $region38: #{ssl_wrapper_forward.1} parent=11 // pred_check_branch
        %275 = sbr.rel (%p273) target = $region40
      $region39: #{ssl_wrapper_forward.1} parent=11 // pred_region
        _
      $region40: #{ssl_wrapper_forward.1} parent=11 // pred_fallthru
        _
    $region12: #{ssl_wrapper_forward.1} parent=5 // pred_fallthru
      _
    %p276 = scmp.lt.s32.totalorder %s14, 2
    // Predicated region
    $region41: #{ssl_wrapper_forward.1} parent=5 // pred_check
      %p277 = pneg %p276
    $region42: #{ssl_wrapper_forward.1} parent=5 // pred_check_branch
      %279 = sbr.rel (%p277) target = $region44
    $region43: #{ssl_wrapper_forward.1} parent=5 // pred_region
      // Predicated region
      $region45: #{ssl_wrapper_forward.1} parent=43 // pred_check
        %p280 = pneg %p48
      $region46: #{ssl_wrapper_forward.1} parent=43 // pred_check_branch
        %282 = sbr.rel (%p280) target = $region48
      $region47: #{ssl_wrapper_forward.1} parent=43 // pred_region
        %s283 = smul.u32 2, %s21
        %p284 = scmp.lt.s32.totalorder %s22, 1
        %s285 = scalar_select %p284, %s22, 1
        %p286 = scmp.lt.s32.totalorder %s283, 1
        %s287 = scalar_select %p286, %s283, 1
        %s288 = smul.addr %s285, 2
        %s289 = sadd.s32 %s287, %s288
        %s290 = smul.addr %s289, 2
        %s291 = scalar_lea.vmem %s0, %s290
        %s292 = smul.u32 2, %s21
      $region48: #{ssl_wrapper_forward.1} parent=43 // pred_fallthru
        _
    $region44: #{ssl_wrapper_forward.1} parent=5 // pred_fallthru
      _
    %p293 = scmp.le.s32.totalorder 1, %s14
    %p294 = scmp.lt.s32.totalorder %s14, 3
    %p295 = pnand %p293, %p294
    %p296 = pneg %p295
    // Predicated region
    $region49: #{ssl_wrapper_forward.1} parent=5 // pred_check
      _
    $region50: #{ssl_wrapper_forward.1} parent=5 // pred_check_branch
      %298 = sbr.rel (%p295) target = $region52
    $region51: #{ssl_wrapper_forward.1} parent=5 // pred_region
      %s299 = ssub.s32 %s14, 1
      %s300 = smul.u32 2, %s23
      %p301 = scmp.lt.s32.totalorder %s24, 1
      %s302 = scalar_select %p301, %s24, 1
      %p303 = scmp.lt.s32.totalorder %s300, 1
      %s304 = scalar_select %p303, %s300, 1
      %s305 = smul.addr %s302, 2
      %s306 = sadd.s32 %s304, %s305
      %s307 = smul.addr %s306, 2
      %s308 = scalar_lea.vmem %s0, %s307
      %p309 = pneg %p54
      %p310 = pneg %p51
      %s311 = smul.u32 2, %s23
      %p312 = scmp.lt.s32.totalorder %s311, 1
      %s313 = scalar_select %p312, %s311, 1
      %s314 = smul.addr %s313, 8
      %s315 = scalar_lea.vmem %s1, %s314
      %p316 = pneg %p80
      %p317 = pneg %p77
      %p318 = pneg %p101
      %p319 = pneg %p98
      %p320 = pneg %p122
      %p321 = pneg %p119
      %p322 = pneg %p143
      %p323 = pneg %p140
      %p324 = pneg %p164
      %p325 = pneg %p161
      %p326 = pneg %p185
      %p327 = pneg %p182
      %p328 = pneg %p206
      %p329 = pneg %p203
      %p330 = pneg %p234
      %p331 = pneg %p231
      %s332 = smul.u32 2, %s23
      %p333 = scmp.lt.s32.totalorder %s24, 1
      %s334 = scalar_select %p333, %s24, 1
      %p335 = scmp.lt.s32.totalorder %s332, 1
      %s336 = scalar_select %p335, %s332, 1
      %s337 = smul.addr %s334, 4
      %s338 = sadd.s32 %s336, %s337
      %s339 = smul.addr %s338, 8
      %s340 = scalar_lea.vmem %s8, %s339
      %s341 = smul.u32 2, %s23
      %p342 = scmp.lt.s32.totalorder %s24, 1
      %s343 = scalar_select %p342, %s24, 1
      %p344 = scmp.lt.s32.totalorder %s341, 1
      %s345 = scalar_select %p344, %s341, 1
      %s346 = smul.addr %s343, 2
      %s347 = sadd.s32 %s345, %s346
      %s348 = smul.addr %s347, 2
      %s349 = scalar_lea.vmem %s0, %s348
      %s350 = smul.u32 2, %s23
      %s351 = smul.u32 2, %s23
      %p352 = scmp.lt.s32.totalorder %s351, 1
      %s353 = scalar_select %p352, %s351, 1
      %s354 = smul.addr %s353, 8
      %s355 = scalar_lea.vmem %s1, %s354
      %s356 = smul.u32 2, %s23
      %s357 = smul.u32 2, %s23
      %p358 = scmp.lt.s32.totalorder %s24, 1
      %s359 = scalar_select %p358, %s24, 1
      %p360 = scmp.lt.s32.totalorder %s357, 1
      %s361 = scalar_select %p360, %s357, 1
      %s362 = smul.addr %s359, 4
      %s363 = sadd.s32 %s361, %s362
      %s364 = smul.addr %s363, 8
      %s365 = scalar_lea.vmem %s8, %s364
      %s366 = smul.u32 2, %s23
      %v368 = vld [vmem:[%s2] sm:$0xff]
      %v369 = vld [vmem:[%s2 + $0x8] sm:$0xff]
      %v370 = vld [vmem:[%s2 + $0x10] sm:$0xff]
      %v371 = vld [vmem:[%s2 + $0x18] sm:$0xff]
      %v372 = vld [vmem:[%s349] sm:$0xf]
      %v373 = vld [vmem:[%s3] sm:$0xff]
      %v374 = vld [vmem:[%s3 + $0x8] sm:$0xff]
      %v375 = vld [vmem:[%s3 + $0x10] sm:$0xff]
      %v376 = vld [vmem:[%s3 + $0x18] sm:$0xff]
      %v377 = vld [vmem:[%s355] sm:$0xff]
      %v378 = vld [vmem:[%s355 + $0x8] sm:$0xff]
      %v379 = vld [vmem:[%s355 + $0x10] sm:$0x1]
      %v380 = vld [vmem:[%s355 + $0x18] sm:$0x1]
      %vm381 = vcmask 72704
      %v383 = vsel %vm381, %v373, 0
      %v386 = vsel %vm381, %v374, 0
      %v389 = vsel %vm381, %v375, 0
      %v392 = vsel %vm381, %v376, 0
      %vm394 = vcmask 1040384
      %v396 = vsel %vm394, %v379, 0
      %v399 = vsel %vm394, %v380, 0
      %401 = vmatprep.subr.mxu0 %v378
      %402 = vmatpush1.msra.mxu0 %v377
      %403 = vmatprep.subr.mxu0 %v399
      %404 = vmatpush1.msra.mxu0 %v396
      %405 = vmatprep.subr.mxu0 0.0
      %406 = vmatpush1.msra.mxu0 0.0
      %407 = vmatprep.subr.mxu0 0.0
      %408 = vmatpush1.msra.mxu0 0.0
      %409 = vmatprep.subr.mxu0 0.0
      %410 = vmatpush1.msra.mxu0 0.0
      %411 = vmatprep.subr.mxu0 0.0
      %412 = vmatpush1.msra.mxu0 0.0
      %413 = vmatprep.subr.mxu0 0.0
      %414 = vmatpush1.msra.mxu0 0.0
      %415 = vmatprep.subr.mxu0 0.0
      %416 = vmatpush1.msra.mxu0 0.0
      %417 = vmatprep.subr.mxu0 0.0
      %418 = vmatpush1.msra.mxu0 0.0
      %419 = vmatprep.subr.mxu0 0.0
      %420 = vmatpush1.msra.mxu0 0.0
      %421 = vmatprep.subr.mxu0 0.0
      %422 = vmatpush1.msra.mxu0 0.0
      %423 = vmatprep.subr.mxu0 0.0
      %424 = vmatpush1.msra.mxu0 0.0
      %425 = vmatprep.subr.mxu0 0.0
      %426 = vmatpush1.msra.mxu0 0.0
      %427 = vmatprep.subr.mxu0 0.0
      %428 = vmatpush1.msra.mxu0 0.0
      %429 = vmatprep.subr.mxu0 0.0
      %430 = vmatpush1.msra.mxu0 0.0
      %431 = vmatprep.subr.mxu0 0.0
      %432 = vmatpush1.msra.mxu0 0.0
      %433 = vmatprep.subr.mxu0 0.0
      %434 = vmatpush1.msra.mxu0 0.0
      %435 = vmatprep.subr.mxu0 0.0
      %436 = vmatpush1.msra.mxu0 0.0
      %437 = vmatprep.subr.mxu0 0.0
      %438 = vmatpush1.msra.mxu0 0.0
      %439 = vmatprep.subr.mxu0 0.0
      %440 = vmatpush1.msra.mxu0 0.0
      %441 = vmatprep.subr.mxu0 0.0
      %442 = vmatpush1.msra.mxu0 0.0
      %443 = vmatprep.subr.mxu0 0.0
      %444 = vmatpush1.msra.mxu0 0.0
      %445 = vmatprep.subr.mxu0 0.0
      %446 = vmatpush1.msra.mxu0 0.0
      %447 = vmatprep.subr.mxu0 0.0
      %448 = vmatpush1.msra.mxu0 0.0
      %449 = vmatprep.subr.mxu0 0.0
      %450 = vmatpush1.msra.mxu0 0.0
      %451 = vmatprep.subr.mxu0 0.0
      %452 = vmatpush1.msra.mxu0 0.0
      %453 = vmatprep.subr.mxu0 0.0
      %454 = vmatpush1.msra.mxu0 0.0
      %455 = vmatprep.subr.mxu0 0.0
      %456 = vmatpush1.msra.mxu0 0.0
      %457 = vmatprep.subr.mxu0 0.0
      %458 = vmatpush1.msra.mxu0 0.0
      %459 = vmatprep.subr.mxu0 0.0
      %460 = vmatpush1.msra.mxu0 0.0
      %461 = vmatprep.subr.mxu0 0.0
      %462 = vmatpush1.msra.mxu0 0.0
      %463 = vmatprep.subr.mxu0 0.0
      %464 = vmatpush1.msra.mxu0 0.0
      %465 = vmatprep.mubr.f32.mxu0 0.0
      %466 = vmatmul.mubr.f32.gmra.mrb[0].mxu0 %v383
      %v467 = vpop.f32.mrb[0].mxu0
      %v468 = vadd.f32 0.0, %v467
      %v469 = vpop.f32.mrb[0].mxu0
      %v470 = vadd.f32 0.0, %v469
      %471 = vmatprep.mubr.f32.mxu0 0.0
      %472 = vmatmul.mubr.f32.gmra.mrb[0].mxu0 %v386
      %v473 = vpop.f32.mrb[0].mxu0
      %v474 = vadd.f32 0.0, %v473
      %v475 = vpop.f32.mrb[0].mxu0
      %v476 = vadd.f32 0.0, %v475
      %477 = vmatprep.mubr.f32.mxu0 0.0
      %478 = vmatmul.mubr.f32.gmra.mrb[0].mxu0 %v389
      %v479 = vpop.f32.mrb[0].mxu0
      %v480 = vadd.f32 0.0, %v479
      %v481 = vpop.f32.mrb[0].mxu0
      %v482 = vadd.f32 0.0, %v481
      %483 = vmatprep.mubr.f32.mxu0 0.0
      %484 = vmatmul.mubr.f32.gmra.mrb[0].mxu0 %v392
      %v485 = vpop.f32.mrb[0].mxu0
      %v486 = vadd.f32 0.0, %v485
      %v487 = vpop.f32.mrb[0].mxu0
      %v488 = vadd.f32 0.0, %v487
      %489 = vdwg.mxu0
      %v492 = vunpack.c.l.s4 1983009808
      %v493 = vunpack.c.0.s8 %v492
      %v494 = vlaneseq
      %v495 = vshrl.u32 %v494, 7
      %v496 = vsub.s32 %v493, %v495
      %v497 = vrot.slane %v372, %v496
      %v498 = vcombine.high %v497, %v497
      %vm499 = vcmask 15360
      %v501 = vsel %vm499, %v368, 0
      %v504 = vsel %vm499, %v369, 0
      %v507 = vsel %vm499, %v370, 0
      %v510 = vsel %vm499, %v371, 0
      %vm512 = vcmask 1041408
      %v513 = vsel %vm512, %v497, 0
      %v515 = vsel %vm512, %v498, 0
      %517 = vmatprep.subr.mxu0 %v515
      %518 = vmatpush1.msra.mxu0 %v513
      %519 = vmatprep.subr.mxu0 0.0
      %520 = vmatpush1.msra.mxu0 0.0
      %521 = vmatprep.subr.mxu0 0.0
      %522 = vmatpush1.msra.mxu0 0.0
      %523 = vmatprep.subr.mxu0 0.0
      %524 = vmatpush1.msra.mxu0 0.0
      %525 = vmatprep.subr.mxu0 0.0
      %526 = vmatpush1.msra.mxu0 0.0
      %527 = vmatprep.subr.mxu0 0.0
      %528 = vmatpush1.msra.mxu0 0.0
      %529 = vmatprep.subr.mxu0 0.0
      %530 = vmatpush1.msra.mxu0 0.0
      %531 = vmatprep.subr.mxu0 0.0
      %532 = vmatpush1.msra.mxu0 0.0
      %533 = vmatprep.subr.mxu0 0.0
      %534 = vmatpush1.msra.mxu0 0.0
      %535 = vmatprep.subr.mxu0 0.0
      %536 = vmatpush1.msra.mxu0 0.0
      %537 = vmatprep.subr.mxu0 0.0
      %538 = vmatpush1.msra.mxu0 0.0
      %539 = vmatprep.subr.mxu0 0.0
      %540 = vmatpush1.msra.mxu0 0.0
      %541 = vmatprep.subr.mxu0 0.0
      %542 = vmatpush1.msra.mxu0 0.0
      %543 = vmatprep.subr.mxu0 0.0
      %544 = vmatpush1.msra.mxu0 0.0
      %545 = vmatprep.subr.mxu0 0.0
      %546 = vmatpush1.msra.mxu0 0.0
      %547 = vmatprep.subr.mxu0 0.0
      %548 = vmatpush1.msra.mxu0 0.0
      %549 = vmatprep.subr.mxu0 0.0
      %550 = vmatpush1.msra.mxu0 0.0
      %551 = vmatprep.subr.mxu0 0.0
      %552 = vmatpush1.msra.mxu0 0.0
      %553 = vmatprep.subr.mxu0 0.0
      %554 = vmatpush1.msra.mxu0 0.0
      %555 = vmatprep.subr.mxu0 0.0
      %556 = vmatpush1.msra.mxu0 0.0
      %557 = vmatprep.subr.mxu0 0.0
      %558 = vmatpush1.msra.mxu0 0.0
      %559 = vmatprep.subr.mxu0 0.0
      %560 = vmatpush1.msra.mxu0 0.0
      %561 = vmatprep.subr.mxu0 0.0
      %562 = vmatpush1.msra.mxu0 0.0
      %563 = vmatprep.subr.mxu0 0.0
      %564 = vmatpush1.msra.mxu0 0.0
      %565 = vmatprep.subr.mxu0 0.0
      %566 = vmatpush1.msra.mxu0 0.0
      %567 = vmatprep.subr.mxu0 0.0
      %568 = vmatpush1.msra.mxu0 0.0
      %569 = vmatprep.subr.mxu0 0.0
      %570 = vmatpush1.msra.mxu0 0.0
      %571 = vmatprep.subr.mxu0 0.0
      %572 = vmatpush1.msra.mxu0 0.0
      %573 = vmatprep.subr.mxu0 0.0
      %574 = vmatpush1.msra.mxu0 0.0
      %575 = vmatprep.subr.mxu0 0.0
      %576 = vmatpush1.msra.mxu0 0.0
      %577 = vmatprep.subr.mxu0 0.0
      %578 = vmatpush1.msra.mxu0 0.0
      %579 = vmatprep.subr.mxu0 0.0
      %580 = vmatpush1.msra.mxu0 0.0
      %581 = vmatprep.mubr.f32.mxu0 0.0
      %582 = vmatmul.mubr.f32.gmra.mrb[0].mxu0 %v501
      %v583 = vpop.f32.mrb[0].mxu0
      %v584 = vadd.f32 %v468, %v583
      %v585 = vpop.f32.mrb[0].mxu0
      %v586 = vadd.f32 %v470, %v585
      %587 = vmatprep.mubr.f32.mxu0 0.0
      %588 = vmatmul.mubr.f32.gmra.mrb[0].mxu0 %v504
      %v589 = vpop.f32.mrb[0].mxu0
      %v590 = vadd.f32 %v474, %v589
      %v591 = vpop.f32.mrb[0].mxu0
      %v592 = vadd.f32 %v476, %v591
      %593 = vmatprep.mubr.f32.mxu0 0.0
      %594 = vmatmul.mubr.f32.gmra.mrb[0].mxu0 %v507
      %v595 = vpop.f32.mrb[0].mxu0
      %v596 = vadd.f32 %v480, %v595
      %v597 = vpop.f32.mrb[0].mxu0
      %v598 = vadd.f32 %v482, %v597
      %599 = vmatprep.mubr.f32.mxu0 0.0
      %600 = vmatmul.mubr.f32.gmra.mrb[0].mxu0 %v510
      %v601 = vpop.f32.mrb[0].mxu0
      %v602 = vadd.f32 %v486, %v601
      %v603 = vpop.f32.mrb[0].mxu0
      %v604 = vadd.f32 %v488, %v603
      %605 = vdwg.mxu0
      %v606 = vmul.f32 %v584, %v584
      %v607 = vmul.f32 %v586, %v586
      %v608 = vmul.f32 %v590, %v590
      %v609 = vmul.f32 %v592, %v592
      %v610 = vmul.f32 %v596, %v596
      %v611 = vmul.f32 %v598, %v598
      %v612 = vmul.f32 %v602, %v602
      %v613 = vmul.f32 %v604, %v604
      %v614 = vmul.f32 %v584, %v606
      %v615 = vmul.f32 %v586, %v607
      %v616 = vmul.f32 %v590, %v608
      %v617 = vmul.f32 %v592, %v609
      %v618 = vmul.f32 %v596, %v610
      %v619 = vmul.f32 %v598, %v611
      %v620 = vmul.f32 %v602, %v612
      %v621 = vmul.f32 %v604, %v613
      %v622 = vmul.f32 %v614, 0.044715
      %v623 = vmul.f32 %v615, 0.044715
      %v624 = vmul.f32 %v616, 0.044715
      %v625 = vmul.f32 %v617, 0.044715
      %v626 = vmul.f32 %v618, 0.044715
      %v627 = vmul.f32 %v619, 0.044715
      %v628 = vmul.f32 %v620, 0.044715
      %v629 = vmul.f32 %v621, 0.044715
      %v630 = vadd.f32 %v584, %v622
      %v631 = vadd.f32 %v586, %v623
      %v632 = vadd.f32 %v590, %v624
      %v633 = vadd.f32 %v592, %v625
      %v634 = vadd.f32 %v596, %v626
      %v635 = vadd.f32 %v598, %v627
      %v636 = vadd.f32 %v602, %v628
      %v637 = vadd.f32 %v604, %v629
      %v638 = vmul.f32 %v630, 0.7978846
      %v639 = vmul.f32 %v631, 0.7978846
      %v640 = vmul.f32 %v632, 0.7978846
      %v641 = vmul.f32 %v633, 0.7978846
      %v642 = vmul.f32 %v634, 0.7978846
      %v643 = vmul.f32 %v635, 0.7978846
      %v644 = vmul.f32 %v636, 0.7978846
      %v645 = vmul.f32 %v637, 0.7978846
      %v646 = vtanh.pop %v638
      %v647 = vtanh.pop %v639
      %v648 = vtanh.pop %v640
      %v649 = vtanh.pop %v641
      %v650 = vtanh.pop %v642
      %v651 = vtanh.pop %v643
      %v652 = vtanh.pop %v644
      %v653 = vtanh.pop %v645
      %v654 = vadd.f32 %v646, 1.0
      %v655 = vadd.f32 %v647, 1.0
      %v656 = vadd.f32 %v648, 1.0
      %v657 = vadd.f32 %v649, 1.0
      %v658 = vadd.f32 %v650, 1.0
      %v659 = vadd.f32 %v651, 1.0
      %v660 = vadd.f32 %v652, 1.0
      %v661 = vadd.f32 %v653, 1.0
      %v662 = vmul.f32 %v654, 0.5
      %v663 = vmul.f32 %v655, 0.5
      %v664 = vmul.f32 %v656, 0.5
      %v665 = vmul.f32 %v657, 0.5
      %v666 = vmul.f32 %v658, 0.5
      %v667 = vmul.f32 %v659, 0.5
      %v668 = vmul.f32 %v660, 0.5
      %v669 = vmul.f32 %v661, 0.5
      %v670 = vmul.f32 %v584, %v662
      %v671 = vmul.f32 %v586, %v663
      %v672 = vmul.f32 %v590, %v664
      %v673 = vmul.f32 %v592, %v665
      %v674 = vmul.f32 %v596, %v666
      %v675 = vmul.f32 %v598, %v667
      %v676 = vmul.f32 %v602, %v668
      %v677 = vmul.f32 %v604, %v669
      %v678 = vld [vmem:[%s4] sm:$0xf]
      %v679 = vld [vmem:[%s4 + $0x4] sm:$0xf]
      %v680 = vld [vmem:[%s4 + $0x8] sm:$0xf]
      %v681 = vld [vmem:[%s4 + $0xc] sm:$0xf]
      %v682 = vpack.c.bf16 %v672, %v670
      %v683 = vpack.c.bf16 %v673, %v671
      %v684 = vpack.c.bf16 %v676, %v674
      %v685 = vpack.c.bf16 %v677, %v675
      %v686 = vld [vmem:[%s5] sm:$0xff]
      %v687 = vld [vmem:[%s5 + $0x8] sm:$0xff]
      %v688 = vld [vmem:[%s5 + $0x10] sm:$0xff]
      %v689 = vld [vmem:[%s5 + $0x18] sm:$0xff]
      %691 = vset.pattern.permute.xlu0 0
      %692 = vperm.xlu0 %691, %v686
      %v693 = vpop.permute.xlu0 %692
      %696 = vset.pattern.permute.xlu0 0
      %697 = vperm.xlu0 %696, %v687
      %v698 = vpop.permute.xlu0 %697
      %701 = vset.pattern.permute.xlu0 0
      %702 = vperm.xlu0 %701, %v688
      %v703 = vpop.permute.xlu0 %702
      %706 = vset.pattern.permute.xlu0 0
      %707 = vperm.xlu0 %706, %v689
      %v708 = vpop.permute.xlu0 %707
      %v714 = vunpack.c.l.b16 %v678
      %v715 = vunpack.c.l.b16 %v679
      %v716 = vunpack.c.l.b16 %v680
      %v717 = vunpack.c.l.b16 %v681
      %v718 = vpack.c.b16 %v715, %v714
      %v719 = vpack.c.b16 %v717, %v716
      %vm720 = vcmask 261120
      %v722 = vsel %vm720, %v718, 0
      %v725 = vsel %vm720, %v719, 0
      %727 = vmatprep.subr.bf16.mxu0 %v683
      %728 = vmatpush1.bf16.msra.mxu0 %v682
      %729 = vmatprep.subr.bf16.mxu0 %v685
      %730 = vmatpush1.bf16.msra.mxu0 %v684
      %731 = vmatprep.subr.bf16.mxu0 0
      %732 = vmatpush1.bf16.msra.mxu0 0
      %733 = vmatprep.subr.bf16.mxu0 0
      %734 = vmatpush1.bf16.msra.mxu0 0
      %735 = vmatprep.subr.bf16.mxu0 0
      %736 = vmatpush1.bf16.msra.mxu0 0
      %737 = vmatprep.subr.bf16.mxu0 0
      %738 = vmatpush1.bf16.msra.mxu0 0
      %739 = vmatprep.subr.bf16.mxu0 0
      %740 = vmatpush1.bf16.msra.mxu0 0
      %741 = vmatprep.subr.bf16.mxu0 0
      %742 = vmatpush1.bf16.msra.mxu0 0
      %743 = vmatprep.subr.bf16.mxu0 0
      %744 = vmatpush1.bf16.msra.mxu0 0
      %745 = vmatprep.subr.bf16.mxu0 0
      %746 = vmatpush1.bf16.msra.mxu0 0
      %747 = vmatprep.subr.bf16.mxu0 0
      %748 = vmatpush1.bf16.msra.mxu0 0
      %749 = vmatprep.subr.bf16.mxu0 0
      %750 = vmatpush1.bf16.msra.mxu0 0
      %751 = vmatprep.subr.bf16.mxu0 0
      %752 = vmatpush1.bf16.msra.mxu0 0
      %753 = vmatprep.subr.bf16.mxu0 0
      %754 = vmatpush1.bf16.msra.mxu0 0
      %755 = vmatprep.subr.bf16.mxu0 0
      %756 = vmatpush1.bf16.msra.mxu0 0
      %757 = vmatprep.subr.bf16.mxu0 0
      %758 = vmatpush1.bf16.msra.mxu0 0
      %759 = vmatprep.mubr.bf16.mxu0 0
      %760 = vmatmul.mubr.bf16.gmra.mrb[0].mxu0 %v722
      %v761 = vpop.f32.mrb[0].mxu0
      %v762 = vadd.f32 %v693, %v761
      %v763 = vpop.f32.mrb[0].mxu0
      %v764 = vadd.f32 %v693, %v763
      %v765 = vpop.f32.mrb[0].mxu0
      %v766 = vadd.f32 %v698, %v765
      %v767 = vpop.f32.mrb[0].mxu0
      %v768 = vadd.f32 %v698, %v767
      %769 = vmatprep.mubr.bf16.mxu0 0
      %770 = vmatmul.mubr.bf16.gmra.mrb[0].mxu0 %v725
      %v771 = vpop.f32.mrb[0].mxu0
      %v772 = vadd.f32 %v703, %v771
      %v773 = vpop.f32.mrb[0].mxu0
      %v774 = vadd.f32 %v703, %v773
      %v775 = vpop.f32.mrb[0].mxu0
      %v776 = vadd.f32 %v708, %v775
      %v777 = vpop.f32.mrb[0].mxu0
      %v778 = vadd.f32 %v708, %v777
      %779 = vdwg.mxu0
      %v780 = vmul.f32 %v762, %v762
      %v781 = vmul.f32 %v764, %v764
      %v782 = vmul.f32 %v766, %v766
      %v783 = vmul.f32 %v768, %v768
      %v784 = vmul.f32 %v772, %v772
      %v785 = vmul.f32 %v774, %v774
      %v786 = vmul.f32 %v776, %v776
      %v787 = vmul.f32 %v778, %v778
      %v788 = vmul.f32 %v762, %v780
      %v789 = vmul.f32 %v764, %v781
      %v790 = vmul.f32 %v766, %v782
      %v791 = vmul.f32 %v768, %v783
      %v792 = vmul.f32 %v772, %v784
      %v793 = vmul.f32 %v774, %v785
      %v794 = vmul.f32 %v776, %v786
      %v795 = vmul.f32 %v778, %v787
      %v796 = vmul.f32 %v788, 0.044715
      %v797 = vmul.f32 %v789, 0.044715
      %v798 = vmul.f32 %v790, 0.044715
      %v799 = vmul.f32 %v791, 0.044715
      %v800 = vmul.f32 %v792, 0.044715
      %v801 = vmul.f32 %v793, 0.044715
      %v802 = vmul.f32 %v794, 0.044715
      %v803 = vmul.f32 %v795, 0.044715
      %v804 = vadd.f32 %v762, %v796
      %v805 = vadd.f32 %v764, %v797
      %v806 = vadd.f32 %v766, %v798
      %v807 = vadd.f32 %v768, %v799
      %v808 = vadd.f32 %v772, %v800
      %v809 = vadd.f32 %v774, %v801
      %v810 = vadd.f32 %v776, %v802
      %v811 = vadd.f32 %v778, %v803
      %v812 = vmul.f32 %v804, 0.7978846
      %v813 = vmul.f32 %v805, 0.7978846
      %v814 = vmul.f32 %v806, 0.7978846
      %v815 = vmul.f32 %v807, 0.7978846
      %v816 = vmul.f32 %v808, 0.7978846
      %v817 = vmul.f32 %v809, 0.7978846
      %v818 = vmul.f32 %v810, 0.7978846
      %v819 = vmul.f32 %v811, 0.7978846
      %v820 = vtanh.pop %v812
      %v821 = vtanh.pop %v813
      %v822 = vtanh.pop %v814
      %v823 = vtanh.pop %v815
      %v824 = vtanh.pop %v816
      %v825 = vtanh.pop %v817
      %v826 = vtanh.pop %v818
      %v827 = vtanh.pop %v819
      %v828 = vadd.f32 %v820, 1.0
      %v829 = vadd.f32 %v821, 1.0
      %v830 = vadd.f32 %v822, 1.0
      %v831 = vadd.f32 %v823, 1.0
      %v832 = vadd.f32 %v824, 1.0
      %v833 = vadd.f32 %v825, 1.0
      %v834 = vadd.f32 %v826, 1.0
      %v835 = vadd.f32 %v827, 1.0
      %v836 = vmul.f32 %v828, 0.5
      %v837 = vmul.f32 %v829, 0.5
      %v838 = vmul.f32 %v830, 0.5
      %v839 = vmul.f32 %v831, 0.5
      %v840 = vmul.f32 %v832, 0.5
      %v841 = vmul.f32 %v833, 0.5
      %v842 = vmul.f32 %v834, 0.5
      %v843 = vmul.f32 %v835, 0.5
      %v844 = vmul.f32 %v762, %v836
      %v845 = vmul.f32 %v764, %v837
      %v846 = vmul.f32 %v766, %v838
      %v847 = vmul.f32 %v768, %v839
      %v848 = vmul.f32 %v772, %v840
      %v849 = vmul.f32 %v774, %v841
      %v850 = vmul.f32 %v776, %v842
      %v851 = vmul.f32 %v778, %v843
      %v852 = vld [vmem:[%s6] sm:$0xf]
      %v853 = vld [vmem:[%s6 + $0x4] sm:$0x1]
      %v854 = vpack.c.bf16 %v846, %v844
      %v855 = vpack.c.bf16 %v847, %v845
      %v856 = vpack.c.bf16 %v850, %v848
      %v857 = vpack.c.bf16 %v851, %v849
      %v858 = vld [vmem:[%s7] sm:$0xff]
      %v859 = vld [vmem:[%s7 + $0x8] sm:$0x3]
      %861 = vset.pattern.permute.xlu0 0
      %862 = vperm.xlu0 %861, %v858
      %v863 = vpop.permute.xlu0 %862
      %866 = vset.pattern.permute.xlu0 0
      %867 = vperm.xlu0 %866, %v859
      %v868 = vpop.permute.xlu0 %867
      %v872 = vunpack.c.l.b16 %v852
      %v873 = vunpack.c.l.b16 %v853
      %v874 = vpack.c.b16 %v873, %v872
      %v876 = vsel %vm720, %v874, 0
      %878 = vmatprep.subr.bf16.mxu0 %v855
      %879 = vmatpush1.bf16.msra.mxu0 %v854
      %880 = vmatprep.subr.bf16.mxu0 %v857
      %881 = vmatpush1.bf16.msra.mxu0 %v856
      %882 = vmatprep.subr.bf16.mxu0 0
      %883 = vmatpush1.bf16.msra.mxu0 0
      %884 = vmatprep.subr.bf16.mxu0 0
      %885 = vmatpush1.bf16.msra.mxu0 0
      %886 = vmatprep.subr.bf16.mxu0 0
      %887 = vmatpush1.bf16.msra.mxu0 0
      %888 = vmatprep.subr.bf16.mxu0 0
      %889 = vmatpush1.bf16.msra.mxu0 0
      %890 = vmatprep.subr.bf16.mxu0 0
      %891 = vmatpush1.bf16.msra.mxu0 0
      %892 = vmatprep.subr.bf16.mxu0 0
      %893 = vmatpush1.bf16.msra.mxu0 0
      %894 = vmatprep.subr.bf16.mxu0 0
      %895 = vmatpush1.bf16.msra.mxu0 0
      %896 = vmatprep.subr.bf16.mxu0 0
      %897 = vmatpush1.bf16.msra.mxu0 0
      %898 = vmatprep.subr.bf16.mxu0 0
      %899 = vmatpush1.bf16.msra.mxu0 0
      %900 = vmatprep.subr.bf16.mxu0 0
      %901 = vmatpush1.bf16.msra.mxu0 0
      %902 = vmatprep.subr.bf16.mxu0 0
      %903 = vmatpush1.bf16.msra.mxu0 0
      %904 = vmatprep.subr.bf16.mxu0 0
      %905 = vmatpush1.bf16.msra.mxu0 0
      %906 = vmatprep.subr.bf16.mxu0 0
      %907 = vmatpush1.bf16.msra.mxu0 0
      %908 = vmatprep.subr.bf16.mxu0 0
      %909 = vmatpush1.bf16.msra.mxu0 0
      %910 = vmatprep.mubr.bf16.mxu0 0
      %911 = vmatmul.mubr.bf16.gmra.mrb[0].mxu0 %v876
      %v912 = vpop.f32.mrb[0].mxu0
      %v913 = vadd.f32 %v863, %v912
      %v914 = vpop.f32.mrb[0].mxu0
      %v915 = vadd.f32 %v863, %v914
      %v916 = vpop.f32.mrb[0].mxu0
      %v917 = vadd.f32 %v868, %v916
      %v918 = vpop.f32.mrb[0].mxu0
      %v919 = vadd.f32 %v868, %v918
      %920 = vdwg.mxu0
      %921 = vst [vmem:[%s365] sm:$0xff] %v913
      %922 = vst [vmem:[%s365 + $0x8] sm:$0xff] %v915
      %923 = vst [vmem:[%s365 + $0x10] sm:$0x3] %v917
      %924 = vst [vmem:[%s365 + $0x18] sm:$0x3] %v919
      %s925 = smul.u32 2, %s23
      %p926 = scmp.lt.s32.totalorder %s24, 1
      %s927 = scalar_select %p926, %s24, 1
      %p928 = scmp.lt.s32.totalorder %s925, 1
      %s929 = scalar_select %p928, %s925, 1
      %s930 = smul.addr %s927, 4
      %s931 = sadd.s32 %s929, %s930
      %s932 = smul.addr %s931, 8
      %s933 = scalar_lea.vmem %s8, %s932
      // Predicated region
      $region53: #{ssl_wrapper_forward.1} parent=51 // pred_check
        %p934 = pneg %p231
      $region54: #{ssl_wrapper_forward.1} parent=51 // pred_check_branch
        %936 = sbr.rel (%p934) target = $region56
      $region55: #{ssl_wrapper_forward.1} parent=51 // pred_region
        %s937 = smul.u32 2, %s23
      $region56: #{ssl_wrapper_forward.1} parent=51 // pred_fallthru
        _
    $region52: #{ssl_wrapper_forward.1} parent=5 // pred_fallthru
      _
    %p938 = scmp.le.s32.totalorder 2, %s14
    // Predicated region
    $region57: #{ssl_wrapper_forward.1} parent=5 // pred_check
      %p939 = pneg %p938
    $region58: #{ssl_wrapper_forward.1} parent=5 // pred_check_branch
      %941 = sbr.rel (%p939) target = $region60
    $region59: #{ssl_wrapper_forward.1} parent=5 // pred_region
      %s942 = ssub.s32 %s14, 2
      // Predicated region
      $region61: #{ssl_wrapper_forward.1} parent=59 // pred_check
        %p943 = pneg %p237
      $region62: #{ssl_wrapper_forward.1} parent=59 // pred_check_branch
        %945 = sbr.rel (%p943) target = $region64
      $region63: #{ssl_wrapper_forward.1} parent=59 // pred_region
        %s946 = smul.u32 2, %s25
        %p947 = scmp.lt.s32.totalorder %s26, 1
        %s948 = scalar_select %p947, %s26, 1
        %p949 = scmp.lt.s32.totalorder %s946, 1
        %s950 = scalar_select %p949, %s946, 1
        %s951 = smul.addr %s948, 4
        %s952 = sadd.s32 %s950, %s951
        %s953 = smul.addr %s952, 8
        %s954 = scalar_lea.vmem %s8, %s953
      $region64: #{ssl_wrapper_forward.1} parent=59 // pred_fallthru
        _
    $region60: #{ssl_wrapper_forward.1} parent=5 // pred_fallthru
      _
  $region6: #{ssl_wrapper_forward.1} parent=0 // loop_footer
    %s18 = sadd.s32 1, %s14
  $region7: #{ssl_wrapper_forward.1} parent=0 // loop_footer_branch
    %13 = sbr.rel target = $region3
  $region8: #{ssl_wrapper_forward.1} parent=0 // loop_exit
    _

</llo_original>
